<compile_context>
chip_gen: v7x
topology: tpu7x:2x2x1
jax: 0.10.0
libtpu: 0.0.40
codegen_flags: <defaults>
</compile_context>

<pallas_src>
import functools

import jax
import jax.numpy as jnp
from jax.experimental import pallas as pl
from jax.experimental.pallas import tpu as pltpu


# ---------------------------------------------------------------------------
# In-kernel helpers.
# ---------------------------------------------------------------------------

def _reduce_lane_groups(y, g, ow, red):
    """Reduce non-overlapping groups of `g` lanes: y (TC, >= ow*g) -> (TC, ow)."""
    if g == 1:
        return y[:, :ow]
    cols = [red(y[:, c * g:(c + 1) * g], axis=-1, keepdims=True) for c in range(ow)]
    return cols[0] if ow == 1 else jnp.concatenate(cols, axis=-1)


def _pool_from_flat(x_ref, w, k, oh, ow, red, comb, cdt):
    """Pool non-overlapping k x k windows straight from the flat (1,TC,H*W) ref.

    Window-row reduction = elementwise comb of the k row slices (VPU);
    window-column reduction = small lane-group reductions.  Returns `oh`
    arrays of shape (TC, ow); per-slice cast avoids a full-tile upcast pass.
    """
    span = ow * k
    rows = []
    for r in range(oh):
        rowv = None
        for i in range(k):
            off = (r * k + i) * w
            sl = x_ref[0, :, off:off + span].astype(cdt)    # (TC, ow*k)
            rowv = sl if rowv is None else comb(rowv, sl)
        rows.append(_reduce_lane_groups(rowv, k, ow, red))  # (TC, ow)
    return rows


def _pool_2x2_from_rows(prev_rows, oh, ow, comb, red):
    """Derive a coarser level from the finer one via exact 2x2 re-reduction."""
    rows = []
    for r in range(oh):
        m = comb(prev_rows[2 * r], prev_rows[2 * r + 1])    # (TC, 2*ow) VALU
        rows.append(_reduce_lane_groups(m, 2, ow, red))     # (TC, ow)
    return rows


def _spp_kernel(x_ref, o_ref, *, levels, w, is_max, compute_dtype):
    """x_ref: (1, TC, H*W); o_ref: (1, TC, out_pad)."""
    red = jnp.max if is_max else jnp.sum
    comb = jnp.maximum if is_max else jnp.add
    cdt = compute_dtype
    tc = x_ref.shape[1]

    nl = len(levels)
    rows_per_level = [None] * nl
    # Finest level (smallest window) straight from the flat tile.
    k, oh, ow = levels[nl - 1]
    rows_per_level[nl - 1] = _pool_from_flat(x_ref, w, k, oh, ow, red, comb, cdt)
    # Coarser levels: hierarchical when windows nest exactly, else from the tile.
    for i in range(nl - 2, -1, -1):
        k, oh, ow = levels[i]
        if k == 2 * levels[i + 1][0]:
            rows_per_level[i] = _pool_2x2_from_rows(rows_per_level[i + 1], oh, ow,
                                                    comb, red)
        else:
            rows_per_level[i] = _pool_from_flat(x_ref, w, k, oh, ow, red, comb, cdt)

    # Assemble every level into one lane-dense value and store it ONCE
    # (unmasked full-width vst); padding lanes are sliced off in the wrapper.
    pieces = []
    for i, (k, oh, ow) in enumerate(levels):
        inv = 1.0 / float(k * k)
        for r in range(oh):
            v = rows_per_level[i][r]                        # (TC, ow)
            if not is_max:
                v = v * inv                                 # single const multiply
            pieces.append(v)
    total = sum(oh * ow for _, oh, ow in levels)
    pad = o_ref.shape[2] - total
    if pad:
        pieces.append(jnp.zeros((tc, pad), cdt))
    full = pieces[0] if len(pieces) == 1 else jnp.concatenate(pieces, axis=-1)
    o_ref[0, :, :] = full.astype(o_ref.dtype)


# ---------------------------------------------------------------------------
# Wrapper-side sizing helpers.
# ---------------------------------------------------------------------------

def _tpu_kind():
    try:
        return jax.devices()[0].device_kind.lower()
    except Exception:
        return ""


def _vmem_plan(kind):
    """Returns (per-tile footprint budget, explicit scoped-VMEM limit) in bytes."""
    if "v7" in kind:                         # 64 MiB physical per TC: headroom
        return 20 << 20, 40 << 20
    if "v6" in kind:                         # 128 MiB physical: use big tiles
        return 48 << 20, 80 << 20
    if "v5 lite" in kind or "v5e" in kind:   # 128 MiB physical, 16 MiB default scoped
        return 32 << 20, 56 << 20
    return 16 << 20, 32 << 20                # unknown / other: conservative


def _per_channel_bytes(hw, in_itemsize, out_pad, out_itemsize):
    # 3x multi-buffered input block + 2x output block + staged f32 result
    # + margin for live f32 row slices.
    return (3 * hw * in_itemsize
            + 2 * out_pad * out_itemsize
            + out_pad * 4
            + 8 * 128 * 4)


def _pick_channel_tile(bs, c, hw, in_itemsize, out_pad, out_itemsize, budget_bytes):
    per_ch = _per_channel_bytes(hw, in_itemsize, out_pad, out_itemsize)
    cands = sorted({d for d in range(8, c + 1, 8) if c % d == 0} | {c})
    fitting = [d for d in cands if d * per_ch <= budget_bytes]
    tc = max(fitting) if fitting else min(cands)
    # Keep enough grid steps for megacore sharding + DMA pipelining, but don't
    # shred blocks below ~512 KiB of input once >= 2 steps exist.
    while bs * (c // tc) < 8:
        smaller = [d for d in cands if d < tc]
        if not smaller:
            break
        nxt = max(smaller)
        if nxt * hw * in_itemsize < (512 << 10) and bs * (c // tc) >= 2:
            break
        tc = nxt
    return tc, per_ch


@functools.partial(jax.jit, static_argnames=("num_levels", "pool_type", "channel_tile"))
def spp_layer(x, num_levels, pool_type="max_pool", channel_tile=None):
    """Pallas implementation of SPPLayer.forward for NCHW input x."""
    bs, c, h, w = x.shape
    levels = []
    for i in range(num_levels):
        k = h // (2 ** i)                    # kernel_size == stride (torch module)
        if k < 1:
            raise ValueError(f"num_levels={num_levels} too large for h={h}")
        oh = (h - k) // k + 1                # floor mode, no padding (torch default)
        ow = (w - k) // k + 1
        if oh < 1 or ow < 1:
            raise ValueError(f"level {i}: kernel {k} larger than input ({h},{w})")
        levels.append((k, oh, ow))
    levels = tuple(levels)
    total = sum(oh * ow for _, oh, ow in levels)
    out_pad = -(-total // 128) * 128         # lane-dense, unmasked store width

    hw = h * w
    itemsize = jnp.dtype(x.dtype).itemsize
    kind = _tpu_kind()
    budget, vmem_limit = _vmem_plan(kind)

    if channel_tile is None:
        tc, per_ch = _pick_channel_tile(bs, c, hw, itemsize, out_pad, itemsize, budget)
    else:
        tc = int(channel_tile)
        if c % tc != 0 or (tc != c and tc % 8 != 0):
            raise ValueError("channel_tile must divide C and be a multiple of 8 (or == C)")
        per_ch = _per_channel_bytes(hw, itemsize, out_pad, itemsize)
    vmem_limit = max(vmem_limit, tc * per_ch + (8 << 20))

    steps = bs * (c // tc)
    is_max = (pool_type == "max_pool")
    # bf16 max is exact; keep bf16 end-to-end where the VPU supports it (not v5e).
    if is_max and x.dtype == jnp.bfloat16 and "v5 lite" not in kind and "v5e" not in kind:
        compute_dtype = jnp.bfloat16
    else:
        compute_dtype = jnp.float32

    kernel = functools.partial(_spp_kernel, levels=levels, w=w, is_max=is_max,
                               compute_dtype=compute_dtype)

    # Free, contiguous reshape: puts H*W on the 128-lane axis (lane-dense DMA).
    xf = x.reshape(bs, c, hw)

    in_spec_kwargs = {}
    if steps >= 3:
        in_spec_kwargs["pipeline_mode"] = pl.Buffered(3)
    in_spec = pl.BlockSpec((1, tc, hw), lambda b, cb: (b, cb, 0), **in_spec_kwargs)

    out3 = pl.pallas_call(
        kernel,
        out_shape=jax.ShapeDtypeStruct((bs, c, out_pad), x.dtype),
        grid=(bs, c // tc),
        in_specs=[in_spec],
        out_specs=pl.BlockSpec((1, tc, out_pad), lambda b, cb: (b, cb, 0)),
        compiler_params=pltpu.CompilerParams(
            dimension_semantics=("parallel", "parallel"),
            vmem_limit_bytes=int(vmem_limit)),
    )(xf)

    # Tiny tail on the small output tensor: per level, flatten (C, oh*ow) C-major
    # and concatenate -> exactly torch.cat([pool_i.view(bs, -1)], dim=-1).
    parts, off = [], 0
    for _, oh, ow in levels:
        n = oh * ow
        parts.append(out3[:, :, off:off + n].reshape(bs, c * n))
        off += n
    return jnp.concatenate(parts, axis=-1)


def _ref_spp(x, num_levels, pool_type="max_pool"):
    """Pure-JAX reference matching the PyTorch module."""
    bs, c, h, w = x.shape
    parts = []
    for i in range(num_levels):
        k = h // (2 ** i)
        oh = (h - k) // k + 1
        ow = (w - k) // k + 1
        xc = x[:, :, : oh * k, : ow * k].astype(jnp.float32)
        xw = xc.reshape(bs, c, oh, k, ow, k)
        p = xw.max(axis=(3, 5)) if pool_type == "max_pool" else xw.mean(axis=(3, 5))
        parts.append(p.reshape(bs, -1).astype(x.dtype))
    return jnp.concatenate(parts, axis=-1)


if __name__ == "__main__":
    key = jax.random.PRNGKey(0)
    k1, k2, k3 = jax.random.split(key, 3)

    # 1) Base case: (2, 4, 16, 16), 3 levels, max & avg.
    x = jax.random.normal(k1, (2, 4, 16, 16), dtype=jnp.float32)
    out = jax.block_until_ready(spp_layer(x, num_levels=3, pool_type="max_pool"))
    assert out.shape == (2, 4 * (1 + 4 + 16)), out.shape
    assert jnp.allclose(out, _ref_spp(x, 3, "max_pool"), atol=1e-6), "max_pool mismatch"

    out_avg = jax.block_until_ready(spp_layer(x, num_levels=3, pool_type="avg_pool"))
    assert jnp.allclose(out_avg, _ref_spp(x, 3, "avg_pool"), atol=1e-5), "avg_pool mismatch"

    # 2) Non-nesting / floor-crop fallback path (k0=9 != 2*k1=8) with odd C.
    x2 = jax.random.normal(k2, (2, 3, 9, 9), dtype=jnp.float32)
    out2 = jax.block_until_ready(spp_layer(x2, num_levels=2, pool_type="max_pool"))
    assert out2.shape == (2, 3 * (1 + 4)), out2.shape
    assert jnp.allclose(out2, _ref_spp(x2, 2, "max_pool"), atol=1e-6), "fallback mismatch"

    # 3) bf16 max, deeper pyramid, multi-channel-tile grid (exercises tc < C and
    #    the Buffered(3) input pipeline).  bf16 max is exact -> exact compare.
    x3 = jax.random.normal(k3, (4, 32, 32, 32), dtype=jnp.bfloat16)
    out3 = jax.block_until_ready(
        spp_layer(x3, num_levels=4, pool_type="max_pool", channel_tile=16))
    assert out3.shape == (4, 32 * (1 + 4 + 16 + 64)), out3.shape
    assert jnp.allclose(out3, _ref_spp(x3, 4, "max_pool")), "bf16 max_pool mismatch"

    print("KERNEL_OK")
</pallas_src>

<mosaic_0001>
module attributes {stable_mosaic.version = 11 : i64} {
  func.func @_spp_kernel(%arg0: i32, %arg1: i32, %arg2: memref<1x4x256xf32, #tpu.memory_space<vmem>>, %arg3: memref<1x4x128xf32, #tpu.memory_space<vmem>>) attributes {dimension_semantics = [#tpu.dimension_semantics<parallel>, #tpu.dimension_semantics<parallel>], iteration_bounds = array<i64: 2, 1>, scalar_prefetch = 0 : i64, scratch_operands = 0 : i64, tpu.core_type = #tpu.core_type<tc>, window_params = [{transform_indices = @transform_0, window_bounds = array<i64: 1, 4, 256>}, {transform_indices = @transform_1, window_bounds = array<i64: 1, 4, 128>}]} {
    %c0 = arith.constant 0 : index
    %c0_0 = arith.constant 0 : index
    %c0_1 = arith.constant 0 : index
    %0 = vector.load %arg2[%c0, %c0_0, %c0_1] : memref<1x4x256xf32, #tpu.memory_space<vmem>>, vector<1x4x16xf32>
    %1 = vector.shape_cast %0 : vector<1x4x16xf32> to vector<4x16xf32>
    %c0_2 = arith.constant 0 : index
    %c0_3 = arith.constant 0 : index
    %c16 = arith.constant 16 : index
    %2 = vector.load %arg2[%c0_2, %c0_3, %c16] : memref<1x4x256xf32, #tpu.memory_space<vmem>>, vector<1x4x16xf32>
    %3 = vector.shape_cast %2 : vector<1x4x16xf32> to vector<4x16xf32>
    %4 = arith.maximumf %1, %3 : vector<4x16xf32>
    %c0_4 = arith.constant 0 : index
    %c0_5 = arith.constant 0 : index
    %c32 = arith.constant 32 : index
    %5 = vector.load %arg2[%c0_4, %c0_5, %c32] : memref<1x4x256xf32, #tpu.memory_space<vmem>>, vector<1x4x16xf32>
    %6 = vector.shape_cast %5 : vector<1x4x16xf32> to vector<4x16xf32>
    %7 = arith.maximumf %4, %6 : vector<4x16xf32>
    %c0_6 = arith.constant 0 : index
    %c0_7 = arith.constant 0 : index
    %c48 = arith.constant 48 : index
    %8 = vector.load %arg2[%c0_6, %c0_7, %c48] : memref<1x4x256xf32, #tpu.memory_space<vmem>>, vector<1x4x16xf32>
    %9 = vector.shape_cast %8 : vector<1x4x16xf32> to vector<4x16xf32>
    %10 = arith.maximumf %7, %9 : vector<4x16xf32>
    %11 = vector.extract_strided_slice %10 {offsets = [0, 0], sizes = [4, 4], strides = [1, 1]} : vector<4x16xf32> to vector<4x4xf32>
    %cst = arith.constant dense<0xFF800000> : vector<4xf32>
    %12 = vector.multi_reduction <maximumf>, %11, %cst [1] : vector<4x4xf32> to vector<4xf32>
    %13 = vector.shape_cast %12 : vector<4xf32> to vector<4x1xf32>
    %14 = vector.extract_strided_slice %10 {offsets = [0, 4], sizes = [4, 4], strides = [1, 1]} : vector<4x16xf32> to vector<4x4xf32>
    %cst_8 = arith.constant dense<0xFF800000> : vector<4xf32>
    %15 = vector.multi_reduction <maximumf>, %14, %cst_8 [1] : vector<4x4xf32> to vector<4xf32>
    %16 = vector.shape_cast %15 : vector<4xf32> to vector<4x1xf32>
    %17 = vector.extract_strided_slice %10 {offsets = [0, 8], sizes = [4, 4], strides = [1, 1]} : vector<4x16xf32> to vector<4x4xf32>
    %cst_9 = arith.constant dense<0xFF800000> : vector<4xf32>
    %18 = vector.multi_reduction <maximumf>, %17, %cst_9 [1] : vector<4x4xf32> to vector<4xf32>
    %19 = vector.shape_cast %18 : vector<4xf32> to vector<4x1xf32>
    %20 = vector.extract_strided_slice %10 {offsets = [0, 12], sizes = [4, 4], strides = [1, 1]} : vector<4x16xf32> to vector<4x4xf32>
    %cst_10 = arith.constant dense<0xFF800000> : vector<4xf32>
    %21 = vector.multi_reduction <maximumf>, %20, %cst_10 [1] : vector<4x4xf32> to vector<4xf32>
    %22 = vector.shape_cast %21 : vector<4xf32> to vector<4x1xf32>
    %23 = tpu.concatenate %13, %16, %19, %22 in 1 : vector<4x1xf32>, vector<4x1xf32>, vector<4x1xf32>, vector<4x1xf32> -> vector<4x4xf32>
    %c0_11 = arith.constant 0 : index
    %c0_12 = arith.constant 0 : index
    %c64 = arith.constant 64 : index
    %24 = vector.load %arg2[%c0_11, %c0_12, %c64] : memref<1x4x256xf32, #tpu.memory_space<vmem>>, vector<1x4x16xf32>
    %25 = vector.shape_cast %24 : vector<1x4x16xf32> to vector<4x16xf32>
    %c0_13 = arith.constant 0 : index
    %c0_14 = arith.constant 0 : index
    %c80 = arith.constant 80 : index
    %26 = vector.load %arg2[%c0_13, %c0_14, %c80] : memref<1x4x256xf32, #tpu.memory_space<vmem>>, vector<1x4x16xf32>
    %27 = vector.shape_cast %26 : vector<1x4x16xf32> to vector<4x16xf32>
    %28 = arith.maximumf %25, %27 : vector<4x16xf32>
    %c0_15 = arith.constant 0 : index
    %c0_16 = arith.constant 0 : index
    %c96 = arith.constant 96 : index
    %29 = vector.load %arg2[%c0_15, %c0_16, %c96] : memref<1x4x256xf32, #tpu.memory_space<vmem>>, vector<1x4x16xf32>
    %30 = vector.shape_cast %29 : vector<1x4x16xf32> to vector<4x16xf32>
    %31 = arith.maximumf %28, %30 : vector<4x16xf32>
    %c0_17 = arith.constant 0 : index
    %c0_18 = arith.constant 0 : index
    %c112 = arith.constant 112 : index
    %32 = vector.load %arg2[%c0_17, %c0_18, %c112] : memref<1x4x256xf32, #tpu.memory_space<vmem>>, vector<1x4x16xf32>
    %33 = vector.shape_cast %32 : vector<1x4x16xf32> to vector<4x16xf32>
    %34 = arith.maximumf %31, %33 : vector<4x16xf32>
    %35 = vector.extract_strided_slice %34 {offsets = [0, 0], sizes = [4, 4], strides = [1, 1]} : vector<4x16xf32> to vector<4x4xf32>
    %cst_19 = arith.constant dense<0xFF800000> : vector<4xf32>
    %36 = vector.multi_reduction <maximumf>, %35, %cst_19 [1] : vector<4x4xf32> to vector<4xf32>
    %37 = vector.shape_cast %36 : vector<4xf32> to vector<4x1xf32>
    %38 = vector.extract_strided_slice %34 {offsets = [0, 4], sizes = [4, 4], strides = [1, 1]} : vector<4x16xf32> to vector<4x4xf32>
    %cst_20 = arith.constant dense<0xFF800000> : vector<4xf32>
    %39 = vector.multi_reduction <maximumf>, %38, %cst_20 [1] : vector<4x4xf32> to vector<4xf32>
    %40 = vector.shape_cast %39 : vector<4xf32> to vector<4x1xf32>
    %41 = vector.extract_strided_slice %34 {offsets = [0, 8], sizes = [4, 4], strides = [1, 1]} : vector<4x16xf32> to vector<4x4xf32>
    %cst_21 = arith.constant dense<0xFF800000> : vector<4xf32>
    %42 = vector.multi_reduction <maximumf>, %41, %cst_21 [1] : vector<4x4xf32> to vector<4xf32>
    %43 = vector.shape_cast %42 : vector<4xf32> to vector<4x1xf32>
    %44 = vector.extract_strided_slice %34 {offsets = [0, 12], sizes = [4, 4], strides = [1, 1]} : vector<4x16xf32> to vector<4x4xf32>
    %cst_22 = arith.constant dense<0xFF800000> : vector<4xf32>
    %45 = vector.multi_reduction <maximumf>, %44, %cst_22 [1] : vector<4x4xf32> to vector<4xf32>
    %46 = vector.shape_cast %45 : vector<4xf32> to vector<4x1xf32>
    %47 = tpu.concatenate %37, %40, %43, %46 in 1 : vector<4x1xf32>, vector<4x1xf32>, vector<4x1xf32>, vector<4x1xf32> -> vector<4x4xf32>
    %c0_23 = arith.constant 0 : index
    %c0_24 = arith.constant 0 : index
    %c128 = arith.constant 128 : index
    %48 = vector.load %arg2[%c0_23, %c0_24, %c128] : memref<1x4x256xf32, #tpu.memory_space<vmem>>, vector<1x4x16xf32>
    %49 = vector.shape_cast %48 : vector<1x4x16xf32> to vector<4x16xf32>
    %c0_25 = arith.constant 0 : index
    %c0_26 = arith.constant 0 : index
    %c144 = arith.constant 144 : index
    %50 = vector.load %arg2[%c0_25, %c0_26, %c144] : memref<1x4x256xf32, #tpu.memory_space<vmem>>, vector<1x4x16xf32>
    %51 = vector.shape_cast %50 : vector<1x4x16xf32> to vector<4x16xf32>
    %52 = arith.maximumf %49, %51 : vector<4x16xf32>
    %c0_27 = arith.constant 0 : index
    %c0_28 = arith.constant 0 : index
    %c160 = arith.constant 160 : index
    %53 = vector.load %arg2[%c0_27, %c0_28, %c160] : memref<1x4x256xf32, #tpu.memory_space<vmem>>, vector<1x4x16xf32>
    %54 = vector.shape_cast %53 : vector<1x4x16xf32> to vector<4x16xf32>
    %55 = arith.maximumf %52, %54 : vector<4x16xf32>
    %c0_29 = arith.constant 0 : index
    %c0_30 = arith.constant 0 : index
    %c176 = arith.constant 176 : index
    %56 = vector.load %arg2[%c0_29, %c0_30, %c176] : memref<1x4x256xf32, #tpu.memory_space<vmem>>, vector<1x4x16xf32>
    %57 = vector.shape_cast %56 : vector<1x4x16xf32> to vector<4x16xf32>
    %58 = arith.maximumf %55, %57 : vector<4x16xf32>
    %59 = vector.extract_strided_slice %58 {offsets = [0, 0], sizes = [4, 4], strides = [1, 1]} : vector<4x16xf32> to vector<4x4xf32>
    %cst_31 = arith.constant dense<0xFF800000> : vector<4xf32>
    %60 = vector.multi_reduction <maximumf>, %59, %cst_31 [1] : vector<4x4xf32> to vector<4xf32>
    %61 = vector.shape_cast %60 : vector<4xf32> to vector<4x1xf32>
    %62 = vector.extract_strided_slice %58 {offsets = [0, 4], sizes = [4, 4], strides = [1, 1]} : vector<4x16xf32> to vector<4x4xf32>
    %cst_32 = arith.constant dense<0xFF800000> : vector<4xf32>
    %63 = vector.multi_reduction <maximumf>, %62, %cst_32 [1] : vector<4x4xf32> to vector<4xf32>
    %64 = vector.shape_cast %63 : vector<4xf32> to vector<4x1xf32>
    %65 = vector.extract_strided_slice %58 {offsets = [0, 8], sizes = [4, 4], strides = [1, 1]} : vector<4x16xf32> to vector<4x4xf32>
    %cst_33 = arith.constant dense<0xFF800000> : vector<4xf32>
    %66 = vector.multi_reduction <maximumf>, %65, %cst_33 [1] : vector<4x4xf32> to vector<4xf32>
    %67 = vector.shape_cast %66 : vector<4xf32> to vector<4x1xf32>
    %68 = vector.extract_strided_slice %58 {offsets = [0, 12], sizes = [4, 4], strides = [1, 1]} : vector<4x16xf32> to vector<4x4xf32>
    %cst_34 = arith.constant dense<0xFF800000> : vector<4xf32>
    %69 = vector.multi_reduction <maximumf>, %68, %cst_34 [1] : vector<4x4xf32> to vector<4xf32>
    %70 = vector.shape_cast %69 : vector<4xf32> to vector<4x1xf32>
    %71 = tpu.concatenate %61, %64, %67, %70 in 1 : vector<4x1xf32>, vector<4x1xf32>, vector<4x1xf32>, vector<4x1xf32> -> vector<4x4xf32>
    %c0_35 = arith.constant 0 : index
    %c0_36 = arith.constant 0 : index
    %c192 = arith.constant 192 : index
    %72 = vector.load %arg2[%c0_35, %c0_36, %c192] : memref<1x4x256xf32, #tpu.memory_space<vmem>>, vector<1x4x16xf32>
    %73 = vector.shape_cast %72 : vector<1x4x16xf32> to vector<4x16xf32>
    %c0_37 = arith.constant 0 : index
    %c0_38 = arith.constant 0 : index
    %c208 = arith.constant 208 : index
    %74 = vector.load %arg2[%c0_37, %c0_38, %c208] : memref<1x4x256xf32, #tpu.memory_space<vmem>>, vector<1x4x16xf32>
    %75 = vector.shape_cast %74 : vector<1x4x16xf32> to vector<4x16xf32>
    %76 = arith.maximumf %73, %75 : vector<4x16xf32>
    %c0_39 = arith.constant 0 : index
    %c0_40 = arith.constant 0 : index
    %c224 = arith.constant 224 : index
    %77 = vector.load %arg2[%c0_39, %c0_40, %c224] : memref<1x4x256xf32, #tpu.memory_space<vmem>>, vector<1x4x16xf32>
    %78 = vector.shape_cast %77 : vector<1x4x16xf32> to vector<4x16xf32>
    %79 = arith.maximumf %76, %78 : vector<4x16xf32>
    %c0_41 = arith.constant 0 : index
    %c0_42 = arith.constant 0 : index
    %c240 = arith.constant 240 : index
    %80 = vector.load %arg2[%c0_41, %c0_42, %c240] : memref<1x4x256xf32, #tpu.memory_space<vmem>>, vector<1x4x16xf32>
    %81 = vector.shape_cast %80 : vector<1x4x16xf32> to vector<4x16xf32>
    %82 = arith.maximumf %79, %81 : vector<4x16xf32>
    %83 = vector.extract_strided_slice %82 {offsets = [0, 0], sizes = [4, 4], strides = [1, 1]} : vector<4x16xf32> to vector<4x4xf32>
    %cst_43 = arith.constant dense<0xFF800000> : vector<4xf32>
    %84 = vector.multi_reduction <maximumf>, %83, %cst_43 [1] : vector<4x4xf32> to vector<4xf32>
    %85 = vector.shape_cast %84 : vector<4xf32> to vector<4x1xf32>
    %86 = vector.extract_strided_slice %82 {offsets = [0, 4], sizes = [4, 4], strides = [1, 1]} : vector<4x16xf32> to vector<4x4xf32>
    %cst_44 = arith.constant dense<0xFF800000> : vector<4xf32>
    %87 = vector.multi_reduction <maximumf>, %86, %cst_44 [1] : vector<4x4xf32> to vector<4xf32>
    %88 = vector.shape_cast %87 : vector<4xf32> to vector<4x1xf32>
    %89 = vector.extract_strided_slice %82 {offsets = [0, 8], sizes = [4, 4], strides = [1, 1]} : vector<4x16xf32> to vector<4x4xf32>
    %cst_45 = arith.constant dense<0xFF800000> : vector<4xf32>
    %90 = vector.multi_reduction <maximumf>, %89, %cst_45 [1] : vector<4x4xf32> to vector<4xf32>
    %91 = vector.shape_cast %90 : vector<4xf32> to vector<4x1xf32>
    %92 = vector.extract_strided_slice %82 {offsets = [0, 12], sizes = [4, 4], strides = [1, 1]} : vector<4x16xf32> to vector<4x4xf32>
    %cst_46 = arith.constant dense<0xFF800000> : vector<4xf32>
    %93 = vector.multi_reduction <maximumf>, %92, %cst_46 [1] : vector<4x4xf32> to vector<4xf32>
    %94 = vector.shape_cast %93 : vector<4xf32> to vector<4x1xf32>
    %95 = tpu.concatenate %85, %88, %91, %94 in 1 : vector<4x1xf32>, vector<4x1xf32>, vector<4x1xf32>, vector<4x1xf32> -> vector<4x4xf32>
    %96 = arith.maximumf %23, %47 : vector<4x4xf32>
    %97 = vector.extract_strided_slice %96 {offsets = [0, 0], sizes = [4, 2], strides = [1, 1]} : vector<4x4xf32> to vector<4x2xf32>
    %cst_47 = arith.constant dense<0xFF800000> : vector<4xf32>
    %98 = vector.multi_reduction <maximumf>, %97, %cst_47 [1] : vector<4x2xf32> to vector<4xf32>
    %99 = vector.shape_cast %98 : vector<4xf32> to vector<4x1xf32>
    %100 = vector.extract_strided_slice %96 {offsets = [0, 2], sizes = [4, 2], strides = [1, 1]} : vector<4x4xf32> to vector<4x2xf32>
    %cst_48 = arith.constant dense<0xFF800000> : vector<4xf32>
    %101 = vector.multi_reduction <maximumf>, %100, %cst_48 [1] : vector<4x2xf32> to vector<4xf32>
    %102 = vector.shape_cast %101 : vector<4xf32> to vector<4x1xf32>
    %103 = tpu.concatenate %99, %102 in 1 : vector<4x1xf32>, vector<4x1xf32> -> vector<4x2xf32>
    %104 = arith.maximumf %71, %95 : vector<4x4xf32>
    %105 = vector.extract_strided_slice %104 {offsets = [0, 0], sizes = [4, 2], strides = [1, 1]} : vector<4x4xf32> to vector<4x2xf32>
    %cst_49 = arith.constant dense<0xFF800000> : vector<4xf32>
    %106 = vector.multi_reduction <maximumf>, %105, %cst_49 [1] : vector<4x2xf32> to vector<4xf32>
    %107 = vector.shape_cast %106 : vector<4xf32> to vector<4x1xf32>
    %108 = vector.extract_strided_slice %104 {offsets = [0, 2], sizes = [4, 2], strides = [1, 1]} : vector<4x4xf32> to vector<4x2xf32>
    %cst_50 = arith.constant dense<0xFF800000> : vector<4xf32>
    %109 = vector.multi_reduction <maximumf>, %108, %cst_50 [1] : vector<4x2xf32> to vector<4xf32>
    %110 = vector.shape_cast %109 : vector<4xf32> to vector<4x1xf32>
    %111 = tpu.concatenate %107, %110 in 1 : vector<4x1xf32>, vector<4x1xf32> -> vector<4x2xf32>
    %112 = arith.maximumf %103, %111 : vector<4x2xf32>
    %cst_51 = arith.constant dense<0xFF800000> : vector<4xf32>
    %113 = vector.multi_reduction <maximumf>, %112, %cst_51 [1] : vector<4x2xf32> to vector<4xf32>
    %114 = vector.shape_cast %113 : vector<4xf32> to vector<4x1xf32>
    %cst_52 = arith.constant 0.000000e+00 : f32
    %115 = vector.broadcast %cst_52 : f32 to vector<4x107xf32>
    %116 = tpu.concatenate %114, %103, %111, %23, %47, %71, %95, %115 in 1 : vector<4x1xf32>, vector<4x2xf32>, vector<4x2xf32>, vector<4x4xf32>, vector<4x4xf32>, vector<4x4xf32>, vector<4x4xf32>, vector<4x107xf32> -> vector<4x128xf32>
    %c0_53 = arith.constant 0 : index
    %c0_54 = arith.constant 0 : index
    %c0_55 = arith.constant 0 : index
    %117 = vector.load %arg3[%c0_53, %c0_54, %c0_55] : memref<1x4x128xf32, #tpu.memory_space<vmem>>, vector<1x4x128xf32>
    %118 = vector.shape_cast %117 : vector<1x4x128xf32> to vector<4x128xf32>
    %119 = vector.shape_cast %116 : vector<4x128xf32> to vector<1x4x128xf32>
    tpu.vector_store %arg3[%c0_53, %c0_54, %c0_55], %119 {strides = array<i32>} : memref<1x4x128xf32, #tpu.memory_space<vmem>>, vector<1x4x128xf32>,
    return
  }
  func.func @transform_0(%arg0: i32, %arg1: i32) -> (i32, i32, i32) {
    %c0_i32 = arith.constant 0 : i32
    %c0_i32_0 = arith.constant 0 : i32
    return %arg0, %arg1, %c0_i32 : i32, i32, i32
  }
  func.func @transform_1(%arg0: i32, %arg1: i32) -> (i32, i32, i32) {
    %c0_i32 = arith.constant 0 : i32
    %c0_i32_0 = arith.constant 0 : i32
    return %arg0, %arg1, %c0_i32 : i32, i32, i32
  }
}

</mosaic_0001>

<llo_original>
// kernel: spp_layer.1
$region0: #{spp_layer.1}
  #allocation0 [shape = 'u32[]', space=smem, size = 0x4, offset = 0x4, fixed_abs, tag = 'smem constant byte address 0x4 - core index']
  #allocation1 [shape = 'u32[144,128]{1,0:T(1,128)}', space=vmem, size = 0x12000, scoped, tag = 'internal scratch']
  %s0 = inlined_call_operand.vmem [shape: f32[2,4,256], index: 0, kind: input, shape index: {}]
  %s1 = inlined_call_operand.vmem [shape: f32[2,4,128], index: 1, kind: output, shape index: {}]
  %s2 = sld [smem:[#allocation0]]
  $region37: #{spp_layer.1} parent=0
    _
  %s4 = ssub.s32 1, %s2
  %s5 = scalar_select 0, %s4, %s2
  loop: start=0, step=1, limit=4
  $region2: #{spp_layer.1} parent=0 // loop_pre_header
    _
  $region3: #{spp_layer.1} parent=0 // loop_header
    %s7 = sphi 0, %s11
    %p8 = scmp.ge.s32.totalorder %s7, 4
    %s14 = sphi 0, %s26
    %s15 = sphi 0, %s22
    %s16 = sphi 0, %s14
    %s17 = sphi 0, %s15
    %s18 = sphi 0, %s16
    %s19 = sphi 0, %s17
    %s31 = sphi 0, %s33
    %s34 = sphi 0, %s31
    %s35 = sphi 0, %s34
    %s51 = sphi 0, %s35
    %s59 = sphi 0, %s61
    %s62 = sphi 0, %s59
    %s63 = sphi 0, %s62
    %s79 = sphi 0, %s63
  $region4: #{spp_layer.1} parent=0 // loop_header_branch
    %10 = sbr.rel (%p8) target = $region8
  $region5: #{spp_layer.1} parent=0 // loop_body
    %s12 = ssub.s32 %s7, 1
    %s13 = ssub.s32 %s7, 2
    %s20 = sadd.s32 1, %s15
    %p21 = scmp.ge.s32.totalorder %s20, 1
    %s22 = scalar_select %p21, 0, %s20
    %s23 = sadd.s32 1, %s14
    %s24 = scalar_select %p21, %s23, %s14
    %p25 = scmp.ge.s32.totalorder %s24, 2
    %s26 = scalar_select %p25, 0, %s24
    %s27 = ssub.s32 %s14, %s26
    %s28 = ssub.s32 %s15, %s22
    %s29 = sor.u32 %s27, %s28
    %p30 = scmp.eq.s32.totalorder %s29, 0
    %s32 = sadd.s32 %s31, 1
    %s33 = scalar_select %p30, %s31, %s32
    %p36 = pneg %p30
    %p37 = scmp.eq.s32.totalorder %s7, 1
    %p38 = por %p36, %p37
    %p39 = scmp.ne.s32.totalorder %s31, %s34
    %p40 = scmp.eq.s32.totalorder %s7, 0
    %p41 = por %p39, %p40
    %p42 = scmp.ne.s32.totalorder %s31, %s34
    %p43 = scmp.eq.s32.totalorder %s12, 1
    %p44 = por %p42, %p43
    %p45 = scmp.ne.s32.totalorder %s34, %s35
    %p46 = scmp.eq.s32.totalorder %s12, 0
    %p47 = por %p45, %p46
    %p48 = scmp.ne.s32.totalorder %s34, %s35
    %p49 = scmp.eq.s32.totalorder %s13, 1
    %p50 = por %p48, %p49
    %p52 = scmp.ne.s32.totalorder %s35, %s51
    %p53 = scmp.eq.s32.totalorder %s13, 0
    %p54 = por %p52, %p53
    %s55 = ssub.s32 %s14, %s26
    %s56 = ssub.s32 %s15, %s22
    %s57 = sor.u32 %s55, %s56
    %p58 = scmp.eq.s32.totalorder %s57, 0
    %s60 = sadd.s32 %s59, 1
    %s61 = scalar_select %p58, %s59, %s60
    %p64 = pneg %p58
    %p65 = scmp.eq.s32.totalorder %s7, 1
    %p66 = por %p64, %p65
    %p67 = scmp.ne.s32.totalorder %s59, %s62
    %p68 = scmp.eq.s32.totalorder %s7, 0
    %p69 = por %p67, %p68
    %p70 = scmp.ne.s32.totalorder %s59, %s62
    %p71 = scmp.eq.s32.totalorder %s12, 1
    %p72 = por %p70, %p71
    %p73 = scmp.ne.s32.totalorder %s62, %s63
    %p74 = scmp.eq.s32.totalorder %s12, 0
    %p75 = por %p73, %p74
    %p76 = scmp.ne.s32.totalorder %s62, %s63
    %p77 = scmp.eq.s32.totalorder %s13, 1
    %p78 = por %p76, %p77
    %p80 = scmp.ne.s32.totalorder %s63, %s79
    %p81 = scmp.eq.s32.totalorder %s13, 0
    %p82 = por %p80, %p81
    %p83 = scmp.le.s32.totalorder 1, %s7
    %p84 = scmp.lt.s32.totalorder %s7, 3
    %p85 = pnand %p83, %p84
    %p86 = pneg %p85
    // Predicated region
    $region9: #{spp_layer.1} parent=5 // pred_check
      _
    $region10: #{spp_layer.1} parent=5 // pred_check_branch
      %88 = sbr.rel (%p85) target = $region12
    $region11: #{spp_layer.1} parent=5 // pred_region
      %s89 = ssub.s32 %s7, 1
    $region12: #{spp_layer.1} parent=5 // pred_fallthru
      _
    %p90 = scmp.lt.s32.totalorder %s7, 2
    // Predicated region
    $region13: #{spp_layer.1} parent=5 // pred_check
      %p91 = pneg %p90
    $region14: #{spp_layer.1} parent=5 // pred_check_branch
      %93 = sbr.rel (%p91) target = $region16
    $region15: #{spp_layer.1} parent=5 // pred_region
      // Predicated region
      $region17: #{spp_layer.1} parent=15 // pred_check
        %p94 = pneg %p41
      $region18: #{spp_layer.1} parent=15 // pred_check_branch
        %96 = sbr.rel (%p94) target = $region20
      $region19: #{spp_layer.1} parent=15 // pred_region
        %p97 = scmp.lt.s32.totalorder %s14, 1
        %s98 = scalar_select %p97, %s14, 1
        %p99 = scmp.lt.s32.totalorder %s15, 0
        %s100 = scalar_select %p99, %s15, 0
        %s101 = smul.addr %s100, 2
        %s102 = smul.addr %s98, 2
        %s103 = sadd.s32 %s101, %s102
        %s104 = smul.addr %s103, 4
        %s105 = scalar_lea.vmem %s0, %s104
      $region20: #{spp_layer.1} parent=15 // pred_fallthru
        _
    $region16: #{spp_layer.1} parent=5 // pred_fallthru
      _
    %p106 = scmp.le.s32.totalorder 1, %s7
    %p107 = scmp.lt.s32.totalorder %s7, 3
    %p108 = pnand %p106, %p107
    %p109 = pneg %p108
    // Predicated region
    $region21: #{spp_layer.1} parent=5 // pred_check
      _
    $region22: #{spp_layer.1} parent=5 // pred_check_branch
      %111 = sbr.rel (%p108) target = $region24
    $region23: #{spp_layer.1} parent=5 // pred_region
      %s112 = ssub.s32 %s7, 1
      %p113 = scmp.lt.s32.totalorder %s16, 1
      %s114 = scalar_select %p113, %s16, 1
      %p115 = scmp.lt.s32.totalorder %s17, 0
      %s116 = scalar_select %p115, %s17, 0
      %s117 = smul.addr %s116, 2
      %s118 = smul.addr %s114, 2
      %s119 = sadd.s32 %s117, %s118
      %s120 = smul.addr %s119, 4
      %s121 = scalar_lea.vmem %s0, %s120
      %p122 = pneg %p47
      %p123 = pneg %p44
      %p124 = pneg %p75
      %p125 = pneg %p72
      %p126 = scmp.lt.s32.totalorder %s16, 1
      %s127 = scalar_select %p126, %s16, 1
      %p128 = scmp.lt.s32.totalorder %s17, 0
      %s129 = scalar_select %p128, %s17, 0
      %s130 = sadd.s32 %s129, %s127
      %s131 = smul.addr %s130, 4
      %s132 = scalar_lea.vmem %s1, %s131
      %p133 = scmp.lt.s32.totalorder %s16, 1
      %s134 = scalar_select %p133, %s16, 1
      %p135 = scmp.lt.s32.totalorder %s17, 0
      %s136 = scalar_select %p135, %s17, 0
      %s137 = smul.addr %s136, 2
      %s138 = smul.addr %s134, 2
      %s139 = sadd.s32 %s137, %s138
      %s140 = smul.addr %s139, 4
      %s141 = scalar_lea.vmem %s0, %s140
      %p142 = scmp.lt.s32.totalorder %s16, 1
      %s143 = scalar_select %p142, %s16, 1
      %p144 = scmp.lt.s32.totalorder %s17, 0
      %s145 = scalar_select %p144, %s17, 0
      %s146 = sadd.s32 %s145, %s143
      %s147 = smul.addr %s146, 4
      %s148 = scalar_lea.vmem %s1, %s147
      %v149 = vld [vmem:[%s141] sm:$0xf]
      %151 = vrot.lane.b32.xlu0 %v149, 112
      %v152 = vpop.permute.xlu0 %151
      %v154 = vmax.f32 %v149, %v152
      %155 = vrot.lane.b32.xlu0 %v149, 96
      %v156 = vpop.permute.xlu0 %155
      %v158 = vmax.f32 %v154, %v156
      %159 = vrot.lane.b32.xlu0 %v149, 80
      %v160 = vpop.permute.xlu0 %159
      %v162 = vmax.f32 %v158, %v160
      %vm163 = vcmask 27648
      %v164 = vsel %vm163, %v162, -inf
      %165 = vmax.xlane.f32.xlu0 %v164
      %v166 = vpop.xlane.xlu0 %165
      %vm167 = vcmask 60448
      %v168 = vsel %vm167, %v162, -inf
      %169 = vmax.xlane.f32.xlu0 %v168
      %v170 = vpop.xlane.xlu0 %169
      %vm171 = vcmask 93248
      %v172 = vsel %vm171, %v162, -inf
      %173 = vmax.xlane.f32.xlu0 %v172
      %v174 = vpop.xlane.xlu0 %173
      %vm175 = vcmask 126048
      %v176 = vsel %vm175, %v162, -inf
      %177 = vmax.xlane.f32.xlu0 %v176
      %v178 = vpop.xlane.xlu0 %177
      %vm179 = vcmask 7168
      %v180 = vsel %vm179, %v166, %v170
      %vm181 = vcmask 15360
      %v182 = vsel %vm181, %v180, %v174
      %vm183 = vcmask 23552
      %v184 = vsel %vm183, %v182, %v178
      %vm185 = vcmask 552448
      %v186 = vsel %vm185, %v162, -inf
      %187 = vmax.xlane.f32.xlu0 %v186
      %v188 = vpop.xlane.xlu0 %187
      %vm189 = vcmask 585248
      %v190 = vsel %vm189, %v162, -inf
      %191 = vmax.xlane.f32.xlu0 %v190
      %v192 = vpop.xlane.xlu0 %191
      %vm193 = vcmask 618048
      %v194 = vsel %vm193, %v162, -inf
      %195 = vmax.xlane.f32.xlu0 %v194
      %v196 = vpop.xlane.xlu0 %195
      %vm197 = vcmask 650848
      %v198 = vsel %vm197, %v162, -inf
      %199 = vmax.xlane.f32.xlu0 %v198
      %v200 = vpop.xlane.xlu0 %199
      %v201 = vsel %vm179, %v188, %v192
      %v202 = vsel %vm181, %v201, %v196
      %v203 = vsel %vm183, %v202, %v200
      %v204 = vld [vmem:[%s141 + $0x4] sm:$0xf]
      %206 = vrot.lane.b32.xlu0 %v204, 112
      %v207 = vpop.permute.xlu0 %206
      %v209 = vmax.f32 %v204, %v207
      %210 = vrot.lane.b32.xlu0 %v204, 96
      %v211 = vpop.permute.xlu0 %210
      %v213 = vmax.f32 %v209, %v211
      %214 = vrot.lane.b32.xlu0 %v204, 80
      %v215 = vpop.permute.xlu0 %214
      %v217 = vmax.f32 %v213, %v215
      %v218 = vsel %vm163, %v217, -inf
      %219 = vmax.xlane.f32.xlu0 %v218
      %v220 = vpop.xlane.xlu0 %219
      %v221 = vsel %vm167, %v217, -inf
      %222 = vmax.xlane.f32.xlu0 %v221
      %v223 = vpop.xlane.xlu0 %222
      %v224 = vsel %vm171, %v217, -inf
      %225 = vmax.xlane.f32.xlu0 %v224
      %v226 = vpop.xlane.xlu0 %225
      %v227 = vsel %vm175, %v217, -inf
      %228 = vmax.xlane.f32.xlu0 %v227
      %v229 = vpop.xlane.xlu0 %228
      %v230 = vsel %vm179, %v220, %v223
      %v231 = vsel %vm181, %v230, %v226
      %v232 = vsel %vm183, %v231, %v229
      %v233 = vsel %vm185, %v217, -inf
      %234 = vmax.xlane.f32.xlu0 %v233
      %v235 = vpop.xlane.xlu0 %234
      %v236 = vsel %vm189, %v217, -inf
      %237 = vmax.xlane.f32.xlu0 %v236
      %v238 = vpop.xlane.xlu0 %237
      %v239 = vsel %vm193, %v217, -inf
      %240 = vmax.xlane.f32.xlu0 %v239
      %v241 = vpop.xlane.xlu0 %240
      %v242 = vsel %vm197, %v217, -inf
      %243 = vmax.xlane.f32.xlu0 %v242
      %v244 = vpop.xlane.xlu0 %243
      %v245 = vsel %vm179, %v235, %v238
      %v246 = vsel %vm181, %v245, %v241
      %v247 = vsel %vm183, %v246, %v244
      %v248 = vmax.f32 %v184, %v203
      %vm249 = vcmask 11264
      %v250 = vsel %vm249, %v248, -inf
      %251 = vmax.xlane.f32.xlu0 %v250
      %v252 = vpop.xlane.xlu0 %251
      %vm253 = vcmask 27664
      %v254 = vsel %vm253, %v248, -inf
      %255 = vmax.xlane.f32.xlu0 %v254
      %v256 = vpop.xlane.xlu0 %255
      %v257 = vsel %vm179, %v252, %v256
      %v258 = vmax.f32 %v232, %v247
      %v259 = vsel %vm249, %v258, -inf
      %260 = vmax.xlane.f32.xlu0 %v259
      %v261 = vpop.xlane.xlu0 %260
      %v262 = vsel %vm253, %v258, -inf
      %263 = vmax.xlane.f32.xlu0 %v262
      %v264 = vpop.xlane.xlu0 %263
      %v265 = vsel %vm179, %v261, %v264
      %v266 = vmax.f32 %v257, %v265
      %v267 = vsel %vm249, %v266, -inf
      %268 = vmax.xlane.f32.xlu0 %v267
      %v269 = vpop.xlane.xlu0 %268
      %271 = vrot.lane.b32.xlu0 %v257, 1
      %v272 = vpop.permute.xlu0 %271
      %275 = vrot.lane.b32.xlu0 %v265, 3
      %v276 = vpop.permute.xlu0 %275
      %279 = vrot.lane.b32.xlu0 %v184, 5
      %v280 = vpop.permute.xlu0 %279
      %283 = vrot.lane.b32.xlu0 %v203, 9
      %v284 = vpop.permute.xlu0 %283
      %287 = vrot.lane.b32.xlu0 %v232, 13
      %v288 = vpop.permute.xlu0 %287
      %291 = vrot.lane.b32.xlu0 %v247, 17
      %v292 = vpop.permute.xlu0 %291
      %v294 = vsel %vm179, %v269, %v272
      %v295 = vsel %vm183, %v294, %v276
      %vm296 = vcmask 39936
      %v297 = vsel %vm296, %v295, %v280
      %vm298 = vcmask 72704
      %v299 = vsel %vm298, %v297, %v284
      %vm300 = vcmask 105472
      %v301 = vsel %vm300, %v299, %v288
      %vm302 = vcmask 138240
      %v303 = vsel %vm302, %v301, %v292
      %vm304 = vcmask 171008
      %v305 = vsel %vm304, %v303, 0.0
      %306 = vst [vmem:[%s148] sm:$0xf] %v305
      %p307 = scmp.lt.s32.totalorder %s16, 1
      %s308 = scalar_select %p307, %s16, 1
      %p309 = scmp.lt.s32.totalorder %s17, 0
      %s310 = scalar_select %p309, %s17, 0
      %s311 = sadd.s32 %s310, %s308
      %s312 = smul.addr %s311, 4
      %s313 = scalar_lea.vmem %s1, %s312
      // Predicated region
      $region25: #{spp_layer.1} parent=23 // pred_check
        %p314 = pneg %p72
      $region26: #{spp_layer.1} parent=23 // pred_check_branch
        %316 = sbr.rel (%p314) target = $region28
      $region27: #{spp_layer.1} parent=23 // pred_region
        _
      $region28: #{spp_layer.1} parent=23 // pred_fallthru
        _
    $region24: #{spp_layer.1} parent=5 // pred_fallthru
      _
    %p317 = scmp.le.s32.totalorder 2, %s7
    // Predicated region
    $region29: #{spp_layer.1} parent=5 // pred_check
      %p318 = pneg %p317
    $region30: #{spp_layer.1} parent=5 // pred_check_branch
      %320 = sbr.rel (%p318) target = $region32
    $region31: #{spp_layer.1} parent=5 // pred_region
      %s321 = ssub.s32 %s7, 2
      // Predicated region
      $region33: #{spp_layer.1} parent=31 // pred_check
        %p322 = pneg %p78
      $region34: #{spp_layer.1} parent=31 // pred_check_branch
        %324 = sbr.rel (%p322) target = $region36
      $region35: #{spp_layer.1} parent=31 // pred_region
        %p325 = scmp.lt.s32.totalorder %s18, 1
        %s326 = scalar_select %p325, %s18, 1
        %p327 = scmp.lt.s32.totalorder %s19, 0
        %s328 = scalar_select %p327, %s19, 0
        %s329 = sadd.s32 %s328, %s326
        %s330 = smul.addr %s329, 4
        %s331 = scalar_lea.vmem %s1, %s330
      $region36: #{spp_layer.1} parent=31 // pred_fallthru
        _
    $region32: #{spp_layer.1} parent=5 // pred_fallthru
      _
  $region6: #{spp_layer.1} parent=0 // loop_footer
    %s11 = sadd.s32 1, %s7
  $region7: #{spp_layer.1} parent=0 // loop_footer_branch
    %6 = sbr.rel target = $region3
  $region8: #{spp_layer.1} parent=0 // loop_exit
    _

</llo_original>
